<compile_context>
chip_gen: v7x
topology: tpu7x:2x2x1
jax: 0.10.0
libtpu: 0.0.40
codegen_flags: <defaults>
</compile_context>

<pallas_src>
import functools

import jax
import jax.numpy as jnp
from jax.experimental import pallas as pl
from jax.experimental.pallas import tpu as pltpu


def _make_mlp_kernel(num_layers):
    def kernel(*refs):
        # refs = (x, mask, gumbel, W_0..W_{L-1}, b_0..b_{L-1}, out_idx)
        x_ref, mask_ref, g_ref = refs[0], refs[1], refs[2]
        w_refs = refs[3:3 + num_layers]
        b_refs = refs[3 + num_layers:3 + 2 * num_layers]
        out_ref = refs[-1]

        # x = x * mask
        x = x_ref[...] * mask_ref[...]

        # hidden layers: relu(x @ W + b)   (W stored as (in, out))
        for i in range(num_layers - 1):
            y = jnp.dot(x, w_refs[i][...], preferred_element_type=jnp.float32)
            x = jnp.maximum(y + b_refs[i][...], 0.0)

        # last layer logits
        logits = jnp.dot(x, w_refs[-1][...], preferred_element_type=jnp.float32)
        logits = logits + b_refs[-1][...]

        # Gumbel-max sampling: argmax(logits + g) ~ Categorical(softmax(logits)),
        # i.e. identical to OneHotCategorical(softmax(logits)).sample().
        scores = logits + g_ref[...]
        smax = jnp.max(scores, axis=1, keepdims=True)
        cols = jax.lax.broadcasted_iota(jnp.int32, scores.shape, 1)
        ncls = scores.shape[1]
        cand = jnp.where(scores == smax, cols, ncls)   # first-index tie-break
        out_ref[...] = jnp.min(cand, axis=1, keepdims=True).astype(jnp.int32)

    return kernel


def orthogonal_init(key, out_dim, in_dim, gain=3.5):
    """Deterministic orthogonal init (torch.nn.init.orthogonal_ semantics)."""
    rows, cols = out_dim, in_dim
    a = jax.random.normal(key, (max(rows, cols), min(rows, cols)), dtype=jnp.float32)
    q, r = jnp.linalg.qr(a)
    q = q * jnp.sign(jnp.diagonal(r))
    if rows < cols:
        q = q.T
    return gain * q[:rows, :cols]          # (out, in), like torch Linear.weight


def init_mlp_params(key, dims):
    """Returns lists of weights (stored transposed, (in,out)) and biases ((1,out))."""
    ws, bs = [], []
    for i in range(1, len(dims)):
        key, kw, kb = jax.random.split(key, 3)
        w = orthogonal_init(kw, dims[i], dims[i - 1], gain=3.5)      # (out, in)
        b = jax.random.uniform(kb, (dims[i],), jnp.float32, -2.1, 2.1)
        ws.append(w.T)                       # (in, out) for x @ W
        bs.append(b.reshape(1, dims[i]))     # (1, out)
    return ws, bs


@functools.partial(jax.jit, static_argnames=("tile_b",))
def mlp_forward(x, mask, gumbel, ws, bs, *, tile_b=128):
    num_layers = len(ws)
    B, d_in = x.shape
    n_cls = ws[-1].shape[1]

    # Pad batch to a multiple of the tile so the grid is exact.
    b_pad = ((B + tile_b - 1) // tile_b) * tile_b
    if b_pad != B:
        pad = ((0, b_pad - B), (0, 0))
        x = jnp.pad(x, pad)
        mask = jnp.pad(mask, pad)
        gumbel = jnp.pad(gumbel, pad)

    tiled = lambda i: (i, 0)      # batch-tiled operands
    resident = lambda i: (0, 0)   # weights/biases: DMA once, stay resident

    in_specs = (
        [pl.BlockSpec((tile_b, d_in), tiled),      # x
         pl.BlockSpec((tile_b, d_in), tiled),      # mask
         pl.BlockSpec((tile_b, n_cls), tiled)]     # gumbel noise
        + [pl.BlockSpec(w.shape, resident) for w in ws]
        + [pl.BlockSpec(b.shape, resident) for b in bs]
    )

    idx = pl.pallas_call(
        _make_mlp_kernel(num_layers),
        out_shape=jax.ShapeDtypeStruct((b_pad, 1), jnp.int32),
        grid=(b_pad // tile_b,),
        in_specs=in_specs,
        out_specs=pl.BlockSpec((tile_b, 1), tiled),
        compiler_params=pltpu.CompilerParams(
            dimension_semantics=("parallel",)),    # v7x: shard over both TCs
    )(x, mask, gumbel, *ws, *bs)

    idx = idx[:B, 0]
    # Cheap lane-dense expansion outside the kernel (forward still returns the
    # OneHotCategorical sample, identical to the PyTorch module).
    return jax.nn.one_hot(idx, n_cls, dtype=jnp.float32)


if __name__ == "__main__":
    # Small shapes consistent with the module: MLP(dims=(16, 32, 8)).
    dims = (16, 32, 8)
    B = 256  # batch rows; tiled into 128-row grid steps (grid=(2,))

    key = jax.random.PRNGKey(0)
    key, kx, km, kg, kp = jax.random.split(key, 5)

    x = jax.random.normal(kx, (B, dims[0]), dtype=jnp.float32)
    mask = (jax.random.uniform(km, (B, dims[0])) > 0.3).astype(jnp.float32)
    gumbel = jax.random.gumbel(kg, (B, dims[-1]), dtype=jnp.float32)
    ws, bs = init_mlp_params(kp, dims)

    out = mlp_forward(x, mask, gumbel, tuple(ws), tuple(bs), tile_b=128)
    out = jax.block_until_ready(out)

    # sanity: each row of the sample is a one-hot vector
    assert out.shape == (B, dims[-1])
    assert bool(jnp.all(jnp.sum(out, axis=1) == 1.0))
    assert bool(jnp.all((out == 0.0) | (out == 1.0)))

    # reference (pure JAX) Gumbel-max with the same noise; allow rare argmax
    # flips from kernel-vs-XLA rounding on near-ties.
    h = x * mask
    for i in range(len(ws) - 1):
        h = jnp.maximum(h @ ws[i] + bs[i], 0.0)
    ref_logits = h @ ws[-1] + bs[-1]
    ref_idx = jnp.argmax(ref_logits + gumbel, axis=1)
    agree = jnp.mean((jnp.argmax(out, axis=1) == ref_idx).astype(jnp.float32))
    assert float(agree) >= 0.99

    print("KERNEL_OK")
</pallas_src>

<mosaic_0001>
module attributes {stable_mosaic.version = 11 : i64} {
  func.func @kernel(%arg0: i32, %arg1: memref<128x16xf32, #tpu.memory_space<vmem>>, %arg2: memref<128x16xf32, #tpu.memory_space<vmem>>, %arg3: memref<128x8xf32, #tpu.memory_space<vmem>>, %arg4: memref<16x32xf32, #tpu.memory_space<vmem>>, %arg5: memref<32x8xf32, #tpu.memory_space<vmem>>, %arg6: memref<1x32xf32, #tpu.memory_space<vmem>>, %arg7: memref<1x8xf32, #tpu.memory_space<vmem>>, %arg8: memref<128x1xi32, #tpu.memory_space<vmem>>) attributes {dimension_semantics = [#tpu.dimension_semantics<parallel>], iteration_bounds = array<i64: 2>, scalar_prefetch = 0 : i64, scratch_operands = 0 : i64, tpu.core_type = #tpu.core_type<tc>, window_params = [{transform_indices = @transform_0, window_bounds = array<i64: 128, 16>}, {transform_indices = @transform_1, window_bounds = array<i64: 128, 16>}, {transform_indices = @transform_2, window_bounds = array<i64: 128, 8>}, {pipeline_mode = #tpu.pipeline_mode<synchronous>, transform_indices = @transform_3, window_bounds = array<i64: 16, 32>}, {pipeline_mode = #tpu.pipeline_mode<synchronous>, transform_indices = @transform_4, window_bounds = array<i64: 32, 8>}, {pipeline_mode = #tpu.pipeline_mode<synchronous>, transform_indices = @transform_5, window_bounds = array<i64: 1, 32>}, {pipeline_mode = #tpu.pipeline_mode<synchronous>, transform_indices = @transform_6, window_bounds = array<i64: 1, 8>}, {transform_indices = @transform_7, window_bounds = array<i64: 128, 1>}]} {
    %c0 = arith.constant 0 : index
    %c0_0 = arith.constant 0 : index
    %0 = vector.load %arg1[%c0, %c0_0] : memref<128x16xf32, #tpu.memory_space<vmem>>, vector<128x16xf32>
    %c0_1 = arith.constant 0 : index
    %c0_2 = arith.constant 0 : index
    %1 = vector.load %arg2[%c0_1, %c0_2] : memref<128x16xf32, #tpu.memory_space<vmem>>, vector<128x16xf32>
    %2 = arith.mulf %0, %1 : vector<128x16xf32>
    %c0_3 = arith.constant 0 : index
    %c0_4 = arith.constant 0 : index
    %3 = vector.load %arg4[%c0_3, %c0_4] : memref<16x32xf32, #tpu.memory_space<vmem>>, vector<16x32xf32>
    %cst = arith.constant dense<0.000000e+00> : vector<128x32xf32>
    %4 = tpu.matmul %2, %3, %cst {dimension_numbers = #tpu.dot_dimension_numbers<[1], [0], [0], [1], [0, 0, 1, 1], [], []>} : vector<128x16xf32>, vector<16x32xf32>, vector<128x32xf32> -> vector<128x32xf32>
    %c0_5 = arith.constant 0 : index
    %c0_6 = arith.constant 0 : index
    %5 = vector.load %arg6[%c0_5, %c0_6] : memref<1x32xf32, #tpu.memory_space<vmem>>, vector<1x32xf32>
    %6 = vector.broadcast %5 : vector<1x32xf32> to vector<128x32xf32>
    %7 = arith.addf %4, %6 : vector<128x32xf32>
    %cst_7 = arith.constant 0.000000e+00 : f32
    %8 = vector.broadcast %cst_7 : f32 to vector<128x32xf32>
    %9 = arith.maximumf %7, %8 : vector<128x32xf32>
    %c0_8 = arith.constant 0 : index
    %c0_9 = arith.constant 0 : index
    %10 = vector.load %arg5[%c0_8, %c0_9] : memref<32x8xf32, #tpu.memory_space<vmem>>, vector<32x8xf32>
    %cst_10 = arith.constant dense<0.000000e+00> : vector<128x8xf32>
    %11 = tpu.matmul %9, %10, %cst_10 {dimension_numbers = #tpu.dot_dimension_numbers<[1], [0], [0], [1], [0, 0, 1, 1], [], []>} : vector<128x32xf32>, vector<32x8xf32>, vector<128x8xf32> -> vector<128x8xf32>
    %c0_11 = arith.constant 0 : index
    %c0_12 = arith.constant 0 : index
    %12 = vector.load %arg7[%c0_11, %c0_12] : memref<1x8xf32, #tpu.memory_space<vmem>>, vector<1x8xf32>
    %13 = vector.broadcast %12 : vector<1x8xf32> to vector<128x8xf32>
    %14 = arith.addf %11, %13 : vector<128x8xf32>
    %c0_13 = arith.constant 0 : index
    %c0_14 = arith.constant 0 : index
    %15 = vector.load %arg3[%c0_13, %c0_14] : memref<128x8xf32, #tpu.memory_space<vmem>>, vector<128x8xf32>
    %16 = arith.addf %14, %15 : vector<128x8xf32>
    %cst_15 = arith.constant dense<0xFF800000> : vector<128xf32>
    %17 = vector.multi_reduction <maximumf>, %16, %cst_15 [1] : vector<128x8xf32> to vector<128xf32>
    %18 = vector.shape_cast %17 : vector<128xf32> to vector<128x1xf32>
    %19 = tpu.iota {dimensions = array<i32: 1>} : vector<128x8xi32>
    %20 = vector.broadcast %18 : vector<128x1xf32> to vector<128x8xf32>
    %21 = arith.cmpf oeq, %16, %20 : vector<128x8xf32>
    %c8_i32 = arith.constant 8 : i32
    %22 = vector.broadcast %c8_i32 : i32 to vector<128x8xi32>
    %23 = arith.select %21, %19, %22 : vector<128x8xi1>, vector<128x8xi32>
    %cst_16 = arith.constant dense<2147483647> : vector<128xi32>
    %24 = vector.multi_reduction <minsi>, %23, %cst_16 [1] : vector<128x8xi32> to vector<128xi32>
    %25 = vector.shape_cast %24 : vector<128xi32> to vector<128x1xi32>
    %c0_17 = arith.constant 0 : index
    %c0_18 = arith.constant 0 : index
    %26 = vector.load %arg8[%c0_17, %c0_18] : memref<128x1xi32, #tpu.memory_space<vmem>>, vector<128x1xi32>
    tpu.vector_store %arg8[%c0_17, %c0_18], %25 {strides = array<i32>} : memref<128x1xi32, #tpu.memory_space<vmem>>, vector<128x1xi32>,
    return
  }
  func.func @transform_0(%arg0: i32) -> (i32, i32) {
    %c0_i32 = arith.constant 0 : i32
    %c0_i32_0 = arith.constant 0 : i32
    return %arg0, %c0_i32 : i32, i32
  }
  func.func @transform_1(%arg0: i32) -> (i32, i32) {
    %c0_i32 = arith.constant 0 : i32
    %c0_i32_0 = arith.constant 0 : i32
    return %arg0, %c0_i32 : i32, i32
  }
  func.func @transform_2(%arg0: i32) -> (i32, i32) {
    %c0_i32 = arith.constant 0 : i32
    %c0_i32_0 = arith.constant 0 : i32
    return %arg0, %c0_i32 : i32, i32
  }
  func.func @transform_3(%arg0: i32) -> (i32, i32) {
    %c0_i32 = arith.constant 0 : i32
    %c0_i32_0 = arith.constant 0 : i32
    %c0_i32_1 = arith.constant 0 : i32
    return %c0_i32, %c0_i32_0 : i32, i32
  }
  func.func @transform_4(%arg0: i32) -> (i32, i32) {
    %c0_i32 = arith.constant 0 : i32
    %c0_i32_0 = arith.constant 0 : i32
    %c0_i32_1 = arith.constant 0 : i32
    return %c0_i32, %c0_i32_0 : i32, i32
  }
  func.func @transform_5(%arg0: i32) -> (i32, i32) {
    %c0_i32 = arith.constant 0 : i32
    %c0_i32_0 = arith.constant 0 : i32
    %c0_i32_1 = arith.constant 0 : i32
    return %c0_i32, %c0_i32_0 : i32, i32
  }
  func.func @transform_6(%arg0: i32) -> (i32, i32) {
    %c0_i32 = arith.constant 0 : i32
    %c0_i32_0 = arith.constant 0 : i32
    %c0_i32_1 = arith.constant 0 : i32
    return %c0_i32, %c0_i32_0 : i32, i32
  }
  func.func @transform_7(%arg0: i32) -> (i32, i32) {
    %c0_i32 = arith.constant 0 : i32
    %c0_i32_0 = arith.constant 0 : i32
    return %arg0, %c0_i32 : i32, i32
  }
}

</mosaic_0001>

<llo_original>
// kernel: mlp_forward.1
$region0: #{mlp_forward.1}
  #allocation0 [shape = 'u32[]', space=smem, size = 0x4, offset = 0x4, fixed_abs, tag = 'smem constant byte address 0x4 - core index']
  #allocation1 [shape = 'u32[144,128]{1,0:T(1,128)}', space=vmem, size = 0x12000, scoped, tag = 'internal scratch']
  %s0 = inlined_call_operand.vmem [shape: f32[256,16], index: 0, kind: input, shape index: {}]
  %s1 = inlined_call_operand.vmem [shape: f32[256,16], index: 1, kind: input, shape index: {}]
  %s2 = inlined_call_operand.vmem [shape: f32[256,8], index: 2, kind: input, shape index: {}]
  %s3 = inlined_call_operand.vmem [shape: f32[16,32], index: 3, kind: input, shape index: {}]
  %s4 = inlined_call_operand.vmem [shape: f32[32,8], index: 4, kind: input, shape index: {}]
  %s5 = inlined_call_operand.vmem [shape: f32[1,32], index: 5, kind: input, shape index: {}]
  %s6 = inlined_call_operand.vmem [shape: f32[1,8], index: 6, kind: input, shape index: {}]
  %s7 = inlined_call_operand.vmem [shape: s32[256,1], index: 7, kind: output, shape index: {}]
  %s8 = sld [smem:[#allocation0]]
  $region61: #{mlp_forward.1} parent=0
    _
  %s10 = ssub.s32 1, %s8
  %s11 = scalar_select 0, %s10, %s8
  loop: start=0, step=1, limit=4
  $region2: #{mlp_forward.1} parent=0 // loop_pre_header
    _
  $region3: #{mlp_forward.1} parent=0 // loop_header
    %s13 = sphi 0, %s17
    %p14 = scmp.ge.s32.totalorder %s13, 4
    %s23 = sphi 0, %s25
    %s26 = sphi 0, %s23
    %s27 = sphi 0, %s26
    %s43 = sphi 0, %s27
    %s49 = sphi 0, %s51
    %s52 = sphi 0, %s49
    %s53 = sphi 0, %s52
    %s69 = sphi 0, %s53
    %s75 = sphi 0, %s77
    %s78 = sphi 0, %s75
    %s79 = sphi 0, %s78
    %s95 = sphi 0, %s79
    %s99 = sphi 0, %s99
    %s101 = sphi 0, %s99
    %s102 = sphi 0, %s101
    %s116 = sphi 0, %s102
    %s120 = sphi 0, %s120
    %s122 = sphi 0, %s120
    %s123 = sphi 0, %s122
    %s137 = sphi 0, %s123
    %s141 = sphi 0, %s141
    %s143 = sphi 0, %s141
    %s144 = sphi 0, %s143
    %s158 = sphi 0, %s144
    %s162 = sphi 0, %s162
    %s164 = sphi 0, %s162
    %s165 = sphi 0, %s164
    %s179 = sphi 0, %s165
    %s185 = sphi 0, %s187
    %s188 = sphi 0, %s185
    %s189 = sphi 0, %s188
    %s205 = sphi 0, %s189
  $region4: #{mlp_forward.1} parent=0 // loop_header_branch
    %16 = sbr.rel (%p14) target = $region8
  $region5: #{mlp_forward.1} parent=0 // loop_body
    %s18 = ssub.s32 %s13, 1
    %s19 = ssub.s32 %s13, 2
    %s20 = sadd.s32 %s13, 1
    %s21 = ssub.s32 %s13, %s20
    %p22 = scmp.eq.s32.totalorder %s21, 0
    %s24 = sadd.s32 %s23, 1
    %s25 = scalar_select %p22, %s23, %s24
    %p28 = pneg %p22
    %p29 = scmp.eq.s32.totalorder %s13, 1
    %p30 = por %p28, %p29
    %p31 = scmp.ne.s32.totalorder %s23, %s26
    %p32 = scmp.eq.s32.totalorder %s13, 0
    %p33 = por %p31, %p32
    %p34 = scmp.ne.s32.totalorder %s23, %s26
    %p35 = scmp.eq.s32.totalorder %s18, 1
    %p36 = por %p34, %p35
    %p37 = scmp.ne.s32.totalorder %s26, %s27
    %p38 = scmp.eq.s32.totalorder %s18, 0
    %p39 = por %p37, %p38
    %p40 = scmp.ne.s32.totalorder %s26, %s27
    %p41 = scmp.eq.s32.totalorder %s19, 1
    %p42 = por %p40, %p41
    %p44 = scmp.ne.s32.totalorder %s27, %s43
    %p45 = scmp.eq.s32.totalorder %s19, 0
    %p46 = por %p44, %p45
    %s47 = ssub.s32 %s13, %s20
    %p48 = scmp.eq.s32.totalorder %s47, 0
    %s50 = sadd.s32 %s49, 1
    %s51 = scalar_select %p48, %s49, %s50
    %p54 = pneg %p48
    %p55 = scmp.eq.s32.totalorder %s13, 1
    %p56 = por %p54, %p55
    %p57 = scmp.ne.s32.totalorder %s49, %s52
    %p58 = scmp.eq.s32.totalorder %s13, 0
    %p59 = por %p57, %p58
    %p60 = scmp.ne.s32.totalorder %s49, %s52
    %p61 = scmp.eq.s32.totalorder %s18, 1
    %p62 = por %p60, %p61
    %p63 = scmp.ne.s32.totalorder %s52, %s53
    %p64 = scmp.eq.s32.totalorder %s18, 0
    %p65 = por %p63, %p64
    %p66 = scmp.ne.s32.totalorder %s52, %s53
    %p67 = scmp.eq.s32.totalorder %s19, 1
    %p68 = por %p66, %p67
    %p70 = scmp.ne.s32.totalorder %s53, %s69
    %p71 = scmp.eq.s32.totalorder %s19, 0
    %p72 = por %p70, %p71
    %s73 = ssub.s32 %s13, %s20
    %p74 = scmp.eq.s32.totalorder %s73, 0
    %s76 = sadd.s32 %s75, 1
    %s77 = scalar_select %p74, %s75, %s76
    %p80 = pneg %p74
    %p81 = scmp.eq.s32.totalorder %s13, 1
    %p82 = por %p80, %p81
    %p83 = scmp.ne.s32.totalorder %s75, %s78
    %p84 = scmp.eq.s32.totalorder %s13, 0
    %p85 = por %p83, %p84
    %p86 = scmp.ne.s32.totalorder %s75, %s78
    %p87 = scmp.eq.s32.totalorder %s18, 1
    %p88 = por %p86, %p87
    %p89 = scmp.ne.s32.totalorder %s78, %s79
    %p90 = scmp.eq.s32.totalorder %s18, 0
    %p91 = por %p89, %p90
    %p92 = scmp.ne.s32.totalorder %s78, %s79
    %p93 = scmp.eq.s32.totalorder %s19, 1
    %p94 = por %p92, %p93
    %p96 = scmp.ne.s32.totalorder %s79, %s95
    %p97 = scmp.eq.s32.totalorder %s19, 0
    %p98 = por %p96, %p97
    %s100 = sadd.s32 %s99, 1
    %p103 = scmp.eq.s32.totalorder %s13, 1
    %p104 = scmp.ne.s32.totalorder %s99, %s101
    %p105 = scmp.eq.s32.totalorder %s13, 0
    %p106 = por %p104, %p105
    %p107 = scmp.ne.s32.totalorder %s99, %s101
    %p108 = scmp.eq.s32.totalorder %s18, 1
    %p109 = por %p107, %p108
    %p110 = scmp.ne.s32.totalorder %s101, %s102
    %p111 = scmp.eq.s32.totalorder %s18, 0
    %p112 = por %p110, %p111
    %p113 = scmp.ne.s32.totalorder %s101, %s102
    %p114 = scmp.eq.s32.totalorder %s19, 1
    %p115 = por %p113, %p114
    %p117 = scmp.ne.s32.totalorder %s102, %s116
    %p118 = scmp.eq.s32.totalorder %s19, 0
    %p119 = por %p117, %p118
    %s121 = sadd.s32 %s120, 1
    %p124 = scmp.eq.s32.totalorder %s13, 1
    %p125 = scmp.ne.s32.totalorder %s120, %s122
    %p126 = scmp.eq.s32.totalorder %s13, 0
    %p127 = por %p125, %p126
    %p128 = scmp.ne.s32.totalorder %s120, %s122
    %p129 = scmp.eq.s32.totalorder %s18, 1
    %p130 = por %p128, %p129
    %p131 = scmp.ne.s32.totalorder %s122, %s123
    %p132 = scmp.eq.s32.totalorder %s18, 0
    %p133 = por %p131, %p132
    %p134 = scmp.ne.s32.totalorder %s122, %s123
    %p135 = scmp.eq.s32.totalorder %s19, 1
    %p136 = por %p134, %p135
    %p138 = scmp.ne.s32.totalorder %s123, %s137
    %p139 = scmp.eq.s32.totalorder %s19, 0
    %p140 = por %p138, %p139
    %s142 = sadd.s32 %s141, 1
    %p145 = scmp.eq.s32.totalorder %s13, 1
    %p146 = scmp.ne.s32.totalorder %s141, %s143
    %p147 = scmp.eq.s32.totalorder %s13, 0
    %p148 = por %p146, %p147
    %p149 = scmp.ne.s32.totalorder %s141, %s143
    %p150 = scmp.eq.s32.totalorder %s18, 1
    %p151 = por %p149, %p150
    %p152 = scmp.ne.s32.totalorder %s143, %s144
    %p153 = scmp.eq.s32.totalorder %s18, 0
    %p154 = por %p152, %p153
    %p155 = scmp.ne.s32.totalorder %s143, %s144
    %p156 = scmp.eq.s32.totalorder %s19, 1
    %p157 = por %p155, %p156
    %p159 = scmp.ne.s32.totalorder %s144, %s158
    %p160 = scmp.eq.s32.totalorder %s19, 0
    %p161 = por %p159, %p160
    %s163 = sadd.s32 %s162, 1
    %p166 = scmp.eq.s32.totalorder %s13, 1
    %p167 = scmp.ne.s32.totalorder %s162, %s164
    %p168 = scmp.eq.s32.totalorder %s13, 0
    %p169 = por %p167, %p168
    %p170 = scmp.ne.s32.totalorder %s162, %s164
    %p171 = scmp.eq.s32.totalorder %s18, 1
    %p172 = por %p170, %p171
    %p173 = scmp.ne.s32.totalorder %s164, %s165
    %p174 = scmp.eq.s32.totalorder %s18, 0
    %p175 = por %p173, %p174
    %p176 = scmp.ne.s32.totalorder %s164, %s165
    %p177 = scmp.eq.s32.totalorder %s19, 1
    %p178 = por %p176, %p177
    %p180 = scmp.ne.s32.totalorder %s165, %s179
    %p181 = scmp.eq.s32.totalorder %s19, 0
    %p182 = por %p180, %p181
    %s183 = ssub.s32 %s13, %s20
    %p184 = scmp.eq.s32.totalorder %s183, 0
    %s186 = sadd.s32 %s185, 1
    %s187 = scalar_select %p184, %s185, %s186
    %p190 = pneg %p184
    %p191 = scmp.eq.s32.totalorder %s13, 1
    %p192 = por %p190, %p191
    %p193 = scmp.ne.s32.totalorder %s185, %s188
    %p194 = scmp.eq.s32.totalorder %s13, 0
    %p195 = por %p193, %p194
    %p196 = scmp.ne.s32.totalorder %s185, %s188
    %p197 = scmp.eq.s32.totalorder %s18, 1
    %p198 = por %p196, %p197
    %p199 = scmp.ne.s32.totalorder %s188, %s189
    %p200 = scmp.eq.s32.totalorder %s18, 0
    %p201 = por %p199, %p200
    %p202 = scmp.ne.s32.totalorder %s188, %s189
    %p203 = scmp.eq.s32.totalorder %s19, 1
    %p204 = por %p202, %p203
    %p206 = scmp.ne.s32.totalorder %s189, %s205
    %p207 = scmp.eq.s32.totalorder %s19, 0
    %p208 = por %p206, %p207
    %p209 = scmp.le.s32.totalorder 1, %s13
    %p210 = scmp.lt.s32.totalorder %s13, 3
    %p211 = pnand %p209, %p210
    %p212 = pneg %p211
    // Predicated region
    $region9: #{mlp_forward.1} parent=5 // pred_check
      _
    $region10: #{mlp_forward.1} parent=5 // pred_check_branch
      %214 = sbr.rel (%p211) target = $region12
    $region11: #{mlp_forward.1} parent=5 // pred_region
      %s215 = ssub.s32 %s13, 1
      // Predicated region
      $region13: #{mlp_forward.1} parent=11 // pred_check
        %p216 = pneg %p112
      $region14: #{mlp_forward.1} parent=11 // pred_check_branch
        %218 = sbr.rel (%p216) target = $region16
      $region15: #{mlp_forward.1} parent=11 // pred_region
        _
      $region16: #{mlp_forward.1} parent=11 // pred_fallthru
        _
      // Predicated region
      $region17: #{mlp_forward.1} parent=11 // pred_check
        %p219 = pneg %p133
      $region18: #{mlp_forward.1} parent=11 // pred_check_branch
        %221 = sbr.rel (%p219) target = $region20
      $region19: #{mlp_forward.1} parent=11 // pred_region
        _
      $region20: #{mlp_forward.1} parent=11 // pred_fallthru
        _
      // Predicated region
      $region21: #{mlp_forward.1} parent=11 // pred_check
        %p222 = pneg %p154
      $region22: #{mlp_forward.1} parent=11 // pred_check_branch
        %224 = sbr.rel (%p222) target = $region24
      $region23: #{mlp_forward.1} parent=11 // pred_region
        _
      $region24: #{mlp_forward.1} parent=11 // pred_fallthru
        _
      // Predicated region
      $region25: #{mlp_forward.1} parent=11 // pred_check
        %p225 = pneg %p175
      $region26: #{mlp_forward.1} parent=11 // pred_check_branch
        %227 = sbr.rel (%p225) target = $region28
      $region27: #{mlp_forward.1} parent=11 // pred_region
        _
      $region28: #{mlp_forward.1} parent=11 // pred_fallthru
        _
    $region12: #{mlp_forward.1} parent=5 // pred_fallthru
      _
    %p228 = scmp.lt.s32.totalorder %s13, 2
    // Predicated region
    $region29: #{mlp_forward.1} parent=5 // pred_check
      %p229 = pneg %p228
    $region30: #{mlp_forward.1} parent=5 // pred_check_branch
      %231 = sbr.rel (%p229) target = $region32
    $region31: #{mlp_forward.1} parent=5 // pred_region
      // Predicated region
      $region33: #{mlp_forward.1} parent=31 // pred_check
        %p232 = pneg %p33
      $region34: #{mlp_forward.1} parent=31 // pred_check_branch
        %234 = sbr.rel (%p232) target = $region36
      $region35: #{mlp_forward.1} parent=31 // pred_region
        %s235 = smul.u32 16, %s13
        %p236 = scmp.lt.s32.totalorder %s235, 31
        %s237 = scalar_select %p236, %s235, 31
        %s238 = smul.addr %s237, 8
        %s239 = scalar_lea.vmem %s0, %s238
        %s240 = smul.u32 16, %s13
      $region36: #{mlp_forward.1} parent=31 // pred_fallthru
        _
      // Predicated region
      $region37: #{mlp_forward.1} parent=31 // pred_check
        %p241 = pneg %p59
      $region38: #{mlp_forward.1} parent=31 // pred_check_branch
        %243 = sbr.rel (%p241) target = $region40
      $region39: #{mlp_forward.1} parent=31 // pred_region
        %s244 = smul.u32 16, %s13
        %p245 = scmp.lt.s32.totalorder %s244, 31
        %s246 = scalar_select %p245, %s244, 31
        %s247 = smul.addr %s246, 8
        %s248 = scalar_lea.vmem %s1, %s247
        %s249 = smul.u32 16, %s13
      $region40: #{mlp_forward.1} parent=31 // pred_fallthru
        _
      // Predicated region
      $region41: #{mlp_forward.1} parent=31 // pred_check
        %p250 = pneg %p85
      $region42: #{mlp_forward.1} parent=31 // pred_check_branch
        %252 = sbr.rel (%p250) target = $region44
      $region43: #{mlp_forward.1} parent=31 // pred_region
        %s253 = smul.u32 16, %s13
        %p254 = scmp.lt.s32.totalorder %s253, 31
        %s255 = scalar_select %p254, %s253, 31
        %s256 = smul.addr %s255, 8
        %s257 = scalar_lea.vmem %s2, %s256
        %s258 = smul.u32 16, %s13
      $region44: #{mlp_forward.1} parent=31 // pred_fallthru
        _
    $region32: #{mlp_forward.1} parent=5 // pred_fallthru
      _
    %p259 = scmp.le.s32.totalorder 1, %s13
    %p260 = scmp.lt.s32.totalorder %s13, 3
    %p261 = pnand %p259, %p260
    %p262 = pneg %p261
    // Predicated region
    $region45: #{mlp_forward.1} parent=5 // pred_check
      _
    $region46: #{mlp_forward.1} parent=5 // pred_check_branch
      %264 = sbr.rel (%p261) target = $region48
    $region47: #{mlp_forward.1} parent=5 // pred_region
      %s265 = ssub.s32 %s13, 1
      %s266 = smul.u32 16, %s18
      %p267 = scmp.lt.s32.totalorder %s266, 31
      %s268 = scalar_select %p267, %s266, 31
      %s269 = smul.addr %s268, 8
      %s270 = scalar_lea.vmem %s0, %s269
      %p271 = pneg %p39
      %p272 = pneg %p36
      %s273 = smul.u32 16, %s18
      %p274 = scmp.lt.s32.totalorder %s273, 31
      %s275 = scalar_select %p274, %s273, 31
      %s276 = smul.addr %s275, 8
      %s277 = scalar_lea.vmem %s1, %s276
      %p278 = pneg %p65
      %p279 = pneg %p62
      %s280 = smul.u32 16, %s18
      %p281 = scmp.lt.s32.totalorder %s280, 31
      %s282 = scalar_select %p281, %s280, 31
      %s283 = smul.addr %s282, 8
      %s284 = scalar_lea.vmem %s2, %s283
      %p285 = pneg %p91
      %p286 = pneg %p88
      %p287 = pneg %p112
      %p288 = pneg %p109
      %p289 = pneg %p133
      %p290 = pneg %p130
      %p291 = pneg %p154
      %p292 = pneg %p151
      %p293 = pneg %p175
      %p294 = pneg %p172
      %p295 = pneg %p201
      %p296 = pneg %p198
      %s297 = smul.u32 16, %s18
      %p298 = scmp.lt.s32.totalorder %s297, 31
      %s299 = scalar_select %p298, %s297, 31
      %s300 = smul.addr %s299, 8
      %s301 = scalar_lea.vmem %s7, %s300
      %s302 = smul.u32 16, %s18
      %p303 = scmp.lt.s32.totalorder %s302, 31
      %s304 = scalar_select %p303, %s302, 31
      %s305 = smul.addr %s304, 8
      %s306 = scalar_lea.vmem %s0, %s305
      %s307 = smul.u32 16, %s18
      %s308 = smul.u32 16, %s18
      %p309 = scmp.lt.s32.totalorder %s308, 31
      %s310 = scalar_select %p309, %s308, 31
      %s311 = smul.addr %s310, 8
      %s312 = scalar_lea.vmem %s1, %s311
      %s313 = smul.u32 16, %s18
      %s314 = smul.u32 16, %s18
      %p315 = scmp.lt.s32.totalorder %s314, 31
      %s316 = scalar_select %p315, %s314, 31
      %s317 = smul.addr %s316, 8
      %s318 = scalar_lea.vmem %s2, %s317
      %s319 = smul.u32 16, %s18
      %s320 = smul.u32 16, %s18
      %p321 = scmp.lt.s32.totalorder %s320, 31
      %s322 = scalar_select %p321, %s320, 31
      %s323 = smul.addr %s322, 8
      %s324 = scalar_lea.vmem %s7, %s323
      %s325 = smul.u32 16, %s18
      %v326 = vld [vmem:[%s306] sm:$0xff]
      %v327 = vld [vmem:[%s306 + $0x8] sm:$0xff]
      %v328 = vld [vmem:[%s306 + $0x10] sm:$0xff]
      %v329 = vld [vmem:[%s306 + $0x18] sm:$0xff]
      %v330 = vld [vmem:[%s306 + $0x20] sm:$0xff]
      %v331 = vld [vmem:[%s306 + $0x28] sm:$0xff]
      %v332 = vld [vmem:[%s306 + $0x30] sm:$0xff]
      %v333 = vld [vmem:[%s306 + $0x38] sm:$0xff]
      %v334 = vld [vmem:[%s306 + $0x40] sm:$0xff]
      %v335 = vld [vmem:[%s306 + $0x48] sm:$0xff]
      %v336 = vld [vmem:[%s306 + $0x50] sm:$0xff]
      %v337 = vld [vmem:[%s306 + $0x58] sm:$0xff]
      %v338 = vld [vmem:[%s306 + $0x60] sm:$0xff]
      %v339 = vld [vmem:[%s306 + $0x68] sm:$0xff]
      %v340 = vld [vmem:[%s306 + $0x70] sm:$0xff]
      %v341 = vld [vmem:[%s306 + $0x78] sm:$0xff]
      %v342 = vld [vmem:[%s312] sm:$0xff]
      %v343 = vld [vmem:[%s312 + $0x8] sm:$0xff]
      %v344 = vld [vmem:[%s312 + $0x10] sm:$0xff]
      %v345 = vld [vmem:[%s312 + $0x18] sm:$0xff]
      %v346 = vld [vmem:[%s312 + $0x20] sm:$0xff]
      %v347 = vld [vmem:[%s312 + $0x28] sm:$0xff]
      %v348 = vld [vmem:[%s312 + $0x30] sm:$0xff]
      %v349 = vld [vmem:[%s312 + $0x38] sm:$0xff]
      %v350 = vld [vmem:[%s312 + $0x40] sm:$0xff]
      %v351 = vld [vmem:[%s312 + $0x48] sm:$0xff]
      %v352 = vld [vmem:[%s312 + $0x50] sm:$0xff]
      %v353 = vld [vmem:[%s312 + $0x58] sm:$0xff]
      %v354 = vld [vmem:[%s312 + $0x60] sm:$0xff]
      %v355 = vld [vmem:[%s312 + $0x68] sm:$0xff]
      %v356 = vld [vmem:[%s312 + $0x70] sm:$0xff]
      %v357 = vld [vmem:[%s312 + $0x78] sm:$0xff]
      %v358 = vmul.f32 %v326, %v342
      %v359 = vmul.f32 %v327, %v343
      %v360 = vmul.f32 %v328, %v344
      %v361 = vmul.f32 %v329, %v345
      %v362 = vmul.f32 %v330, %v346
      %v363 = vmul.f32 %v331, %v347
      %v364 = vmul.f32 %v332, %v348
      %v365 = vmul.f32 %v333, %v349
      %v366 = vmul.f32 %v334, %v350
      %v367 = vmul.f32 %v335, %v351
      %v368 = vmul.f32 %v336, %v352
      %v369 = vmul.f32 %v337, %v353
      %v370 = vmul.f32 %v338, %v354
      %v371 = vmul.f32 %v339, %v355
      %v372 = vmul.f32 %v340, %v356
      %v373 = vmul.f32 %v341, %v357
      %v374 = vld [vmem:[%s3] sm:$0xff]
      %v375 = vld [vmem:[%s3 + $0x8] sm:$0xff]
      %v376 = vld [vmem:[%s5] sm:$0x1]
      %v378 = vlaneseq
      %v379 = vshrl.u32 %v378, 7
      %v380 = vsub.s32 0, %v379
      %v381 = vrot.slane %v376, %v380
      %vm383 = vcmask 130048
      %v385 = vsel %vm383, %v358, 0
      %v388 = vsel %vm383, %v359, 0
      %v391 = vsel %vm383, %v360, 0
      %v394 = vsel %vm383, %v361, 0
      %v397 = vsel %vm383, %v362, 0
      %v400 = vsel %vm383, %v363, 0
      %v403 = vsel %vm383, %v364, 0
      %v406 = vsel %vm383, %v365, 0
      %v409 = vsel %vm383, %v366, 0
      %v412 = vsel %vm383, %v367, 0
      %v415 = vsel %vm383, %v368, 0
      %v418 = vsel %vm383, %v369, 0
      %v421 = vsel %vm383, %v370, 0
      %v424 = vsel %vm383, %v371, 0
      %v427 = vsel %vm383, %v372, 0
      %v430 = vsel %vm383, %v373, 0
      %432 = vmatprep.subr.mxu0 0.0
      %433 = vmatpush1.msra.mxu0 %v374
      %434 = vmatprep.subr.mxu0 0.0
      %435 = vmatpush1.msra.mxu0 %v375
      %436 = vmatprep.subr.mxu0 0.0
      %437 = vmatpush1.msra.mxu0 0.0
      %438 = vmatprep.subr.mxu0 0.0
      %439 = vmatpush1.msra.mxu0 0.0
      %440 = vmatprep.subr.mxu0 0.0
      %441 = vmatpush1.msra.mxu0 0.0
      %442 = vmatprep.subr.mxu0 0.0
      %443 = vmatpush1.msra.mxu0 0.0
      %444 = vmatprep.subr.mxu0 0.0
      %445 = vmatpush1.msra.mxu0 0.0
      %446 = vmatprep.subr.mxu0 0.0
      %447 = vmatpush1.msra.mxu0 0.0
      %448 = vmatprep.subr.mxu0 0.0
      %449 = vmatpush1.msra.mxu0 0.0
      %450 = vmatprep.subr.mxu0 0.0
      %451 = vmatpush1.msra.mxu0 0.0
      %452 = vmatprep.subr.mxu0 0.0
      %453 = vmatpush1.msra.mxu0 0.0
      %454 = vmatprep.subr.mxu0 0.0
      %455 = vmatpush1.msra.mxu0 0.0
      %456 = vmatprep.subr.mxu0 0.0
      %457 = vmatpush1.msra.mxu0 0.0
      %458 = vmatprep.subr.mxu0 0.0
      %459 = vmatpush1.msra.mxu0 0.0
      %460 = vmatprep.subr.mxu0 0.0
      %461 = vmatpush1.msra.mxu0 0.0
      %462 = vmatprep.subr.mxu0 0.0
      %463 = vmatpush1.msra.mxu0 0.0
      %464 = vmatprep.subr.mxu0 0.0
      %465 = vmatpush1.msra.mxu0 0.0
      %466 = vmatprep.subr.mxu0 0.0
      %467 = vmatpush1.msra.mxu0 0.0
      %468 = vmatprep.subr.mxu0 0.0
      %469 = vmatpush1.msra.mxu0 0.0
      %470 = vmatprep.subr.mxu0 0.0
      %471 = vmatpush1.msra.mxu0 0.0
      %472 = vmatprep.subr.mxu0 0.0
      %473 = vmatpush1.msra.mxu0 0.0
      %474 = vmatprep.subr.mxu0 0.0
      %475 = vmatpush1.msra.mxu0 0.0
      %476 = vmatprep.subr.mxu0 0.0
      %477 = vmatpush1.msra.mxu0 0.0
      %478 = vmatprep.subr.mxu0 0.0
      %479 = vmatpush1.msra.mxu0 0.0
      %480 = vmatprep.subr.mxu0 0.0
      %481 = vmatpush1.msra.mxu0 0.0
      %482 = vmatprep.subr.mxu0 0.0
      %483 = vmatpush1.msra.mxu0 0.0
      %484 = vmatprep.subr.mxu0 0.0
      %485 = vmatpush1.msra.mxu0 0.0
      %486 = vmatprep.subr.mxu0 0.0
      %487 = vmatpush1.msra.mxu0 0.0
      %488 = vmatprep.subr.mxu0 0.0
      %489 = vmatpush1.msra.mxu0 0.0
      %490 = vmatprep.subr.mxu0 0.0
      %491 = vmatpush1.msra.mxu0 0.0
      %492 = vmatprep.subr.mxu0 0.0
      %493 = vmatpush1.msra.mxu0 0.0
      %494 = vmatprep.subr.mxu0 0.0
      %495 = vmatpush1.msra.mxu0 0.0
      %496 = vmatprep.mubr.f32.mxu0 0.0
      %497 = vmatmul.mubr.f32.gmra.mrb[0].mxu0 %v385
      %v498 = vpop.f32.mrb[0].mxu0
      %v499 = vadd.f32 %v381, %v498
      %v500 = vpop.f32.mrb[0].mxu0
      %501 = vmatprep.mubr.f32.mxu0 0.0
      %502 = vmatmul.mubr.f32.gmra.mrb[0].mxu0 %v388
      %v503 = vpop.f32.mrb[0].mxu0
      %v504 = vadd.f32 %v381, %v503
      %v505 = vpop.f32.mrb[0].mxu0
      %506 = vmatprep.mubr.f32.mxu0 0.0
      %507 = vmatmul.mubr.f32.gmra.mrb[0].mxu0 %v391
      %v508 = vpop.f32.mrb[0].mxu0
      %v509 = vadd.f32 %v381, %v508
      %v510 = vpop.f32.mrb[0].mxu0
      %511 = vmatprep.mubr.f32.mxu0 0.0
      %512 = vmatmul.mubr.f32.gmra.mrb[0].mxu0 %v394
      %v513 = vpop.f32.mrb[0].mxu0
      %v514 = vadd.f32 %v381, %v513
      %v515 = vpop.f32.mrb[0].mxu0
      %516 = vmatprep.mubr.f32.mxu0 0.0
      %517 = vmatmul.mubr.f32.gmra.mrb[0].mxu0 %v397
      %v518 = vpop.f32.mrb[0].mxu0
      %v519 = vadd.f32 %v381, %v518
      %v520 = vpop.f32.mrb[0].mxu0
      %521 = vmatprep.mubr.f32.mxu0 0.0
      %522 = vmatmul.mubr.f32.gmra.mrb[0].mxu0 %v400
      %v523 = vpop.f32.mrb[0].mxu0
      %v524 = vadd.f32 %v381, %v523
      %v525 = vpop.f32.mrb[0].mxu0
      %526 = vmatprep.mubr.f32.mxu0 0.0
      %527 = vmatmul.mubr.f32.gmra.mrb[0].mxu0 %v403
      %v528 = vpop.f32.mrb[0].mxu0
      %v529 = vadd.f32 %v381, %v528
      %v530 = vpop.f32.mrb[0].mxu0
      %531 = vmatprep.mubr.f32.mxu0 0.0
      %532 = vmatmul.mubr.f32.gmra.mrb[0].mxu0 %v406
      %v533 = vpop.f32.mrb[0].mxu0
      %v534 = vadd.f32 %v381, %v533
      %v535 = vpop.f32.mrb[0].mxu0
      %536 = vmatprep.mubr.f32.mxu0 0.0
      %537 = vmatmul.mubr.f32.gmra.mrb[0].mxu0 %v409
      %v538 = vpop.f32.mrb[0].mxu0
      %v539 = vadd.f32 %v381, %v538
      %v540 = vpop.f32.mrb[0].mxu0
      %541 = vmatprep.mubr.f32.mxu0 0.0
      %542 = vmatmul.mubr.f32.gmra.mrb[0].mxu0 %v412
      %v543 = vpop.f32.mrb[0].mxu0
      %v544 = vadd.f32 %v381, %v543
      %v545 = vpop.f32.mrb[0].mxu0
      %546 = vmatprep.mubr.f32.mxu0 0.0
      %547 = vmatmul.mubr.f32.gmra.mrb[0].mxu0 %v415
      %v548 = vpop.f32.mrb[0].mxu0
      %v549 = vadd.f32 %v381, %v548
      %v550 = vpop.f32.mrb[0].mxu0
      %551 = vmatprep.mubr.f32.mxu0 0.0
      %552 = vmatmul.mubr.f32.gmra.mrb[0].mxu0 %v418
      %v553 = vpop.f32.mrb[0].mxu0
      %v554 = vadd.f32 %v381, %v553
      %v555 = vpop.f32.mrb[0].mxu0
      %556 = vmatprep.mubr.f32.mxu0 0.0
      %557 = vmatmul.mubr.f32.gmra.mrb[0].mxu0 %v421
      %v558 = vpop.f32.mrb[0].mxu0
      %v559 = vadd.f32 %v381, %v558
      %v560 = vpop.f32.mrb[0].mxu0
      %561 = vmatprep.mubr.f32.mxu0 0.0
      %562 = vmatmul.mubr.f32.gmra.mrb[0].mxu0 %v424
      %v563 = vpop.f32.mrb[0].mxu0
      %v564 = vadd.f32 %v381, %v563
      %v565 = vpop.f32.mrb[0].mxu0
      %566 = vmatprep.mubr.f32.mxu0 0.0
      %567 = vmatmul.mubr.f32.gmra.mrb[0].mxu0 %v427
      %v568 = vpop.f32.mrb[0].mxu0
      %v569 = vadd.f32 %v381, %v568
      %v570 = vpop.f32.mrb[0].mxu0
      %571 = vmatprep.mubr.f32.mxu0 0.0
      %572 = vmatmul.mubr.f32.gmra.mrb[0].mxu0 %v430
      %v573 = vpop.f32.mrb[0].mxu0
      %v574 = vadd.f32 %v381, %v573
      %v575 = vpop.f32.mrb[0].mxu0
      %576 = vdwg.mxu0
      %v577 = vmax.f32 %v499, 0.0
      %v578 = vmax.f32 %v504, 0.0
      %v579 = vmax.f32 %v509, 0.0
      %v580 = vmax.f32 %v514, 0.0
      %v581 = vmax.f32 %v519, 0.0
      %v582 = vmax.f32 %v524, 0.0
      %v583 = vmax.f32 %v529, 0.0
      %v584 = vmax.f32 %v534, 0.0
      %v585 = vmax.f32 %v539, 0.0
      %v586 = vmax.f32 %v544, 0.0
      %v587 = vmax.f32 %v549, 0.0
      %v588 = vmax.f32 %v554, 0.0
      %v589 = vmax.f32 %v559, 0.0
      %v590 = vmax.f32 %v564, 0.0
      %v591 = vmax.f32 %v569, 0.0
      %v592 = vmax.f32 %v574, 0.0
      %v593 = vld [vmem:[%s4] sm:$0xff]
      %v594 = vld [vmem:[%s4 + $0x8] sm:$0xff]
      %v595 = vld [vmem:[%s4 + $0x10] sm:$0xff]
      %v596 = vld [vmem:[%s4 + $0x18] sm:$0xff]
      %v597 = vld [vmem:[%s6] sm:$0x1]
      %v599 = vlaneseq
      %v600 = vshrl.u32 %v599, 7
      %v601 = vsub.s32 0, %v600
      %v602 = vrot.slane %v597, %v601
      %vm604 = vcmask 261120
      %v606 = vsel %vm604, %v577, 0
      %v609 = vsel %vm604, %v578, 0
      %v612 = vsel %vm604, %v579, 0
      %v615 = vsel %vm604, %v580, 0
      %v618 = vsel %vm604, %v581, 0
      %v621 = vsel %vm604, %v582, 0
      %v624 = vsel %vm604, %v583, 0
      %v627 = vsel %vm604, %v584, 0
      %v630 = vsel %vm604, %v585, 0
      %v633 = vsel %vm604, %v586, 0
      %v636 = vsel %vm604, %v587, 0
      %v639 = vsel %vm604, %v588, 0
      %v642 = vsel %vm604, %v589, 0
      %v645 = vsel %vm604, %v590, 0
      %v648 = vsel %vm604, %v591, 0
      %v651 = vsel %vm604, %v592, 0
      %653 = vmatprep.subr.mxu0 0.0
      %654 = vmatpush1.msra.mxu0 %v593
      %655 = vmatprep.subr.mxu0 0.0
      %656 = vmatpush1.msra.mxu0 %v594
      %657 = vmatprep.subr.mxu0 0.0
      %658 = vmatpush1.msra.mxu0 %v595
      %659 = vmatprep.subr.mxu0 0.0
      %660 = vmatpush1.msra.mxu0 %v596
      %661 = vmatprep.subr.mxu0 0.0
      %662 = vmatpush1.msra.mxu0 0.0
      %663 = vmatprep.subr.mxu0 0.0
      %664 = vmatpush1.msra.mxu0 0.0
      %665 = vmatprep.subr.mxu0 0.0
      %666 = vmatpush1.msra.mxu0 0.0
      %667 = vmatprep.subr.mxu0 0.0
      %668 = vmatpush1.msra.mxu0 0.0
      %669 = vmatprep.subr.mxu0 0.0
      %670 = vmatpush1.msra.mxu0 0.0
      %671 = vmatprep.subr.mxu0 0.0
      %672 = vmatpush1.msra.mxu0 0.0
      %673 = vmatprep.subr.mxu0 0.0
      %674 = vmatpush1.msra.mxu0 0.0
      %675 = vmatprep.subr.mxu0 0.0
      %676 = vmatpush1.msra.mxu0 0.0
      %677 = vmatprep.subr.mxu0 0.0
      %678 = vmatpush1.msra.mxu0 0.0
      %679 = vmatprep.subr.mxu0 0.0
      %680 = vmatpush1.msra.mxu0 0.0
      %681 = vmatprep.subr.mxu0 0.0
      %682 = vmatpush1.msra.mxu0 0.0
      %683 = vmatprep.subr.mxu0 0.0
      %684 = vmatpush1.msra.mxu0 0.0
      %685 = vmatprep.subr.mxu0 0.0
      %686 = vmatpush1.msra.mxu0 0.0
      %687 = vmatprep.subr.mxu0 0.0
      %688 = vmatpush1.msra.mxu0 0.0
      %689 = vmatprep.subr.mxu0 0.0
      %690 = vmatpush1.msra.mxu0 0.0
      %691 = vmatprep.subr.mxu0 0.0
      %692 = vmatpush1.msra.mxu0 0.0
      %693 = vmatprep.subr.mxu0 0.0
      %694 = vmatpush1.msra.mxu0 0.0
      %695 = vmatprep.subr.mxu0 0.0
      %696 = vmatpush1.msra.mxu0 0.0
      %697 = vmatprep.subr.mxu0 0.0
      %698 = vmatpush1.msra.mxu0 0.0
      %699 = vmatprep.subr.mxu0 0.0
      %700 = vmatpush1.msra.mxu0 0.0
      %701 = vmatprep.subr.mxu0 0.0
      %702 = vmatpush1.msra.mxu0 0.0
      %703 = vmatprep.subr.mxu0 0.0
      %704 = vmatpush1.msra.mxu0 0.0
      %705 = vmatprep.subr.mxu0 0.0
      %706 = vmatpush1.msra.mxu0 0.0
      %707 = vmatprep.subr.mxu0 0.0
      %708 = vmatpush1.msra.mxu0 0.0
      %709 = vmatprep.subr.mxu0 0.0
      %710 = vmatpush1.msra.mxu0 0.0
      %711 = vmatprep.subr.mxu0 0.0
      %712 = vmatpush1.msra.mxu0 0.0
      %713 = vmatprep.subr.mxu0 0.0
      %714 = vmatpush1.msra.mxu0 0.0
      %715 = vmatprep.subr.mxu0 0.0
      %716 = vmatpush1.msra.mxu0 0.0
      %717 = vmatprep.mubr.f32.mxu0 0.0
      %718 = vmatmul.mubr.f32.gmra.mrb[0].mxu0 %v606
      %v719 = vpop.f32.mrb[0].mxu0
      %v720 = vadd.f32 %v602, %v719
      %v721 = vpop.f32.mrb[0].mxu0
      %722 = vmatprep.mubr.f32.mxu0 0.0
      %723 = vmatmul.mubr.f32.gmra.mrb[0].mxu0 %v609
      %v724 = vpop.f32.mrb[0].mxu0
      %v725 = vadd.f32 %v602, %v724
      %v726 = vpop.f32.mrb[0].mxu0
      %727 = vmatprep.mubr.f32.mxu0 0.0
      %728 = vmatmul.mubr.f32.gmra.mrb[0].mxu0 %v612
      %v729 = vpop.f32.mrb[0].mxu0
      %v730 = vadd.f32 %v602, %v729
      %v731 = vpop.f32.mrb[0].mxu0
      %732 = vmatprep.mubr.f32.mxu0 0.0
      %733 = vmatmul.mubr.f32.gmra.mrb[0].mxu0 %v615
      %v734 = vpop.f32.mrb[0].mxu0
      %v735 = vadd.f32 %v602, %v734
      %v736 = vpop.f32.mrb[0].mxu0
      %737 = vmatprep.mubr.f32.mxu0 0.0
      %738 = vmatmul.mubr.f32.gmra.mrb[0].mxu0 %v618
      %v739 = vpop.f32.mrb[0].mxu0
      %v740 = vadd.f32 %v602, %v739
      %v741 = vpop.f32.mrb[0].mxu0
      %742 = vmatprep.mubr.f32.mxu0 0.0
      %743 = vmatmul.mubr.f32.gmra.mrb[0].mxu0 %v621
      %v744 = vpop.f32.mrb[0].mxu0
      %v745 = vadd.f32 %v602, %v744
      %v746 = vpop.f32.mrb[0].mxu0
      %747 = vmatprep.mubr.f32.mxu0 0.0
      %748 = vmatmul.mubr.f32.gmra.mrb[0].mxu0 %v624
      %v749 = vpop.f32.mrb[0].mxu0
      %v750 = vadd.f32 %v602, %v749
      %v751 = vpop.f32.mrb[0].mxu0
      %752 = vmatprep.mubr.f32.mxu0 0.0
      %753 = vmatmul.mubr.f32.gmra.mrb[0].mxu0 %v627
      %v754 = vpop.f32.mrb[0].mxu0
      %v755 = vadd.f32 %v602, %v754
      %v756 = vpop.f32.mrb[0].mxu0
      %757 = vmatprep.mubr.f32.mxu0 0.0
      %758 = vmatmul.mubr.f32.gmra.mrb[0].mxu0 %v630
      %v759 = vpop.f32.mrb[0].mxu0
      %v760 = vadd.f32 %v602, %v759
      %v761 = vpop.f32.mrb[0].mxu0
      %762 = vmatprep.mubr.f32.mxu0 0.0
      %763 = vmatmul.mubr.f32.gmra.mrb[0].mxu0 %v633
      %v764 = vpop.f32.mrb[0].mxu0
      %v765 = vadd.f32 %v602, %v764
      %v766 = vpop.f32.mrb[0].mxu0
      %767 = vmatprep.mubr.f32.mxu0 0.0
      %768 = vmatmul.mubr.f32.gmra.mrb[0].mxu0 %v636
      %v769 = vpop.f32.mrb[0].mxu0
      %v770 = vadd.f32 %v602, %v769
      %v771 = vpop.f32.mrb[0].mxu0
      %772 = vmatprep.mubr.f32.mxu0 0.0
      %773 = vmatmul.mubr.f32.gmra.mrb[0].mxu0 %v639
      %v774 = vpop.f32.mrb[0].mxu0
      %v775 = vadd.f32 %v602, %v774
      %v776 = vpop.f32.mrb[0].mxu0
      %777 = vmatprep.mubr.f32.mxu0 0.0
      %778 = vmatmul.mubr.f32.gmra.mrb[0].mxu0 %v642
      %v779 = vpop.f32.mrb[0].mxu0
      %v780 = vadd.f32 %v602, %v779
      %v781 = vpop.f32.mrb[0].mxu0
      %782 = vmatprep.mubr.f32.mxu0 0.0
      %783 = vmatmul.mubr.f32.gmra.mrb[0].mxu0 %v645
      %v784 = vpop.f32.mrb[0].mxu0
      %v785 = vadd.f32 %v602, %v784
      %v786 = vpop.f32.mrb[0].mxu0
      %787 = vmatprep.mubr.f32.mxu0 0.0
      %788 = vmatmul.mubr.f32.gmra.mrb[0].mxu0 %v648
      %v789 = vpop.f32.mrb[0].mxu0
      %v790 = vadd.f32 %v602, %v789
      %v791 = vpop.f32.mrb[0].mxu0
      %792 = vmatprep.mubr.f32.mxu0 0.0
      %793 = vmatmul.mubr.f32.gmra.mrb[0].mxu0 %v651
      %v794 = vpop.f32.mrb[0].mxu0
      %v795 = vadd.f32 %v602, %v794
      %v796 = vpop.f32.mrb[0].mxu0
      %797 = vdwg.mxu0
      %v798 = vld [vmem:[%s318] sm:$0xff]
      %v799 = vld [vmem:[%s318 + $0x8] sm:$0xff]
      %v800 = vld [vmem:[%s318 + $0x10] sm:$0xff]
      %v801 = vld [vmem:[%s318 + $0x18] sm:$0xff]
      %v802 = vld [vmem:[%s318 + $0x20] sm:$0xff]
      %v803 = vld [vmem:[%s318 + $0x28] sm:$0xff]
      %v804 = vld [vmem:[%s318 + $0x30] sm:$0xff]
      %v805 = vld [vmem:[%s318 + $0x38] sm:$0xff]
      %v806 = vld [vmem:[%s318 + $0x40] sm:$0xff]
      %v807 = vld [vmem:[%s318 + $0x48] sm:$0xff]
      %v808 = vld [vmem:[%s318 + $0x50] sm:$0xff]
      %v809 = vld [vmem:[%s318 + $0x58] sm:$0xff]
      %v810 = vld [vmem:[%s318 + $0x60] sm:$0xff]
      %v811 = vld [vmem:[%s318 + $0x68] sm:$0xff]
      %v812 = vld [vmem:[%s318 + $0x70] sm:$0xff]
      %v813 = vld [vmem:[%s318 + $0x78] sm:$0xff]
      %v814 = vadd.f32 %v720, %v798
      %v815 = vadd.f32 %v725, %v799
      %v816 = vadd.f32 %v730, %v800
      %v817 = vadd.f32 %v735, %v801
      %v818 = vadd.f32 %v740, %v802
      %v819 = vadd.f32 %v745, %v803
      %v820 = vadd.f32 %v750, %v804
      %v821 = vadd.f32 %v755, %v805
      %v822 = vadd.f32 %v760, %v806
      %v823 = vadd.f32 %v765, %v807
      %v824 = vadd.f32 %v770, %v808
      %v825 = vadd.f32 %v775, %v809
      %v826 = vadd.f32 %v780, %v810
      %v827 = vadd.f32 %v785, %v811
      %v828 = vadd.f32 %v790, %v812
      %v829 = vadd.f32 %v795, %v813
      %vm830 = vcmask 64512
      %v831 = vsel %vm830, %v814, -inf
      %832 = vmax.xlane.f32.xlu0 %v831
      %v833 = vpop.xlane.xlu0 %832
      %v834 = vsel %vm830, %v815, -inf
      %835 = vmax.xlane.f32.xlu0 %v834
      %v836 = vpop.xlane.xlu0 %835
      %v837 = vsel %vm830, %v816, -inf
      %838 = vmax.xlane.f32.xlu0 %v837
      %v839 = vpop.xlane.xlu0 %838
      %v840 = vsel %vm830, %v817, -inf
      %841 = vmax.xlane.f32.xlu0 %v840
      %v842 = vpop.xlane.xlu0 %841
      %v843 = vsel %vm830, %v818, -inf
      %844 = vmax.xlane.f32.xlu0 %v843
      %v845 = vpop.xlane.xlu0 %844
      %v846 = vsel %vm830, %v819, -inf
      %847 = vmax.xlane.f32.xlu0 %v846
      %v848 = vpop.xlane.xlu0 %847
      %v849 = vsel %vm830, %v820, -inf
      %850 = vmax.xlane.f32.xlu0 %v849
      %v851 = vpop.xlane.xlu0 %850
      %v852 = vsel %vm830, %v821, -inf
      %853 = vmax.xlane.f32.xlu0 %v852
      %v854 = vpop.xlane.xlu0 %853
      %v855 = vsel %vm830, %v822, -inf
      %856 = vmax.xlane.f32.xlu0 %v855
      %v857 = vpop.xlane.xlu0 %856
      %v858 = vsel %vm830, %v823, -inf
      %859 = vmax.xlane.f32.xlu0 %v858
      %v860 = vpop.xlane.xlu0 %859
      %v861 = vsel %vm830, %v824, -inf
      %862 = vmax.xlane.f32.xlu0 %v861
      %v863 = vpop.xlane.xlu0 %862
      %v864 = vsel %vm830, %v825, -inf
      %865 = vmax.xlane.f32.xlu0 %v864
      %v866 = vpop.xlane.xlu0 %865
      %v867 = vsel %vm830, %v826, -inf
      %868 = vmax.xlane.f32.xlu0 %v867
      %v869 = vpop.xlane.xlu0 %868
      %v870 = vsel %vm830, %v827, -inf
      %871 = vmax.xlane.f32.xlu0 %v870
      %v872 = vpop.xlane.xlu0 %871
      %v873 = vsel %vm830, %v828, -inf
      %874 = vmax.xlane.f32.xlu0 %v873
      %v875 = vpop.xlane.xlu0 %874
      %v876 = vsel %vm830, %v829, -inf
      %877 = vmax.xlane.f32.xlu0 %v876
      %v878 = vpop.xlane.xlu0 %877
      %v879 = vlaneseq
      %v880 = vand.u32 %v879, 127
      %vm881 = vcmp.eq.f32.partialorder %v814, %v833
      %vm882 = vcmp.eq.f32.partialorder %v815, %v836
      %vm883 = vcmp.eq.f32.partialorder %v816, %v839
      %vm884 = vcmp.eq.f32.partialorder %v817, %v842
      %vm885 = vcmp.eq.f32.partialorder %v818, %v845
      %vm886 = vcmp.eq.f32.partialorder %v819, %v848
      %vm887 = vcmp.eq.f32.partialorder %v820, %v851
      %vm888 = vcmp.eq.f32.partialorder %v821, %v854
      %vm889 = vcmp.eq.f32.partialorder %v822, %v857
      %vm890 = vcmp.eq.f32.partialorder %v823, %v860
      %vm891 = vcmp.eq.f32.partialorder %v824, %v863
      %vm892 = vcmp.eq.f32.partialorder %v825, %v866
      %vm893 = vcmp.eq.f32.partialorder %v826, %v869
      %vm894 = vcmp.eq.f32.partialorder %v827, %v872
      %vm895 = vcmp.eq.f32.partialorder %v828, %v875
      %vm896 = vcmp.eq.f32.partialorder %v829, %v878
      %v897 = vsel %vm881, %v880, 8
      %v898 = vsel %vm882, %v880, 8
      %v899 = vsel %vm883, %v880, 8
      %v900 = vsel %vm884, %v880, 8
      %v901 = vsel %vm885, %v880, 8
      %v902 = vsel %vm886, %v880, 8
      %v903 = vsel %vm887, %v880, 8
      %v904 = vsel %vm888, %v880, 8
      %v905 = vsel %vm889, %v880, 8
      %v906 = vsel %vm890, %v880, 8
      %v907 = vsel %vm891, %v880, 8
      %v908 = vsel %vm892, %v880, 8
      %v909 = vsel %vm893, %v880, 8
      %v910 = vsel %vm894, %v880, 8
      %v911 = vsel %vm895, %v880, 8
      %v912 = vsel %vm896, %v880, 8
      %v913 = vsel %vm830, %v897, 2147483647
      %v914 = vand.u32 %v913, 65535
      %v915 = vshra.s32 %v913, 16
      %v916 = vcvt.s32.f32 %v914
      %v917 = vcvt.s32.f32 %v915
      %918 = vmin.xlane.f32.xlu0 %v917
      %v919 = vpop.xlane.xlu0 %918
      %vm920 = vcmp.eq.f32.partialorder %v917, %v919
      %v921 = vsel %vm920, %v916, inf
      %922 = vmin.xlane.f32.xlu0 %v921
      %v923 = vpop.xlane.xlu0 %922
      %v924 = vcvt.f32.s32 %v923
      %v925 = vcvt.f32.s32 %v919
      %v926 = vshll.u32 %v925, 16
      %v927 = vadd.s32 %v926, %v924
      %v928 = vsel %vm830, %v898, 2147483647
      %v929 = vand.u32 %v928, 65535
      %v930 = vshra.s32 %v928, 16
      %v931 = vcvt.s32.f32 %v929
      %v932 = vcvt.s32.f32 %v930
      %933 = vmin.xlane.f32.xlu0 %v932
      %v934 = vpop.xlane.xlu0 %933
      %vm935 = vcmp.eq.f32.partialorder %v932, %v934
      %v936 = vsel %vm935, %v931, inf
      %937 = vmin.xlane.f32.xlu0 %v936
      %v938 = vpop.xlane.xlu0 %937
      %v939 = vcvt.f32.s32 %v938
      %v940 = vcvt.f32.s32 %v934
      %v941 = vshll.u32 %v940, 16
      %v942 = vadd.s32 %v941, %v939
      %v943 = vsel %vm830, %v899, 2147483647
      %v944 = vand.u32 %v943, 65535
      %v945 = vshra.s32 %v943, 16
      %v946 = vcvt.s32.f32 %v944
      %v947 = vcvt.s32.f32 %v945
      %948 = vmin.xlane.f32.xlu0 %v947
      %v949 = vpop.xlane.xlu0 %948
      %vm950 = vcmp.eq.f32.partialorder %v947, %v949
      %v951 = vsel %vm950, %v946, inf
      %952 = vmin.xlane.f32.xlu0 %v951
      %v953 = vpop.xlane.xlu0 %952
      %v954 = vcvt.f32.s32 %v953
      %v955 = vcvt.f32.s32 %v949
      %v956 = vshll.u32 %v955, 16
      %v957 = vadd.s32 %v956, %v954
      %v958 = vsel %vm830, %v900, 2147483647
      %v959 = vand.u32 %v958, 65535
      %v960 = vshra.s32 %v958, 16
      %v961 = vcvt.s32.f32 %v959
      %v962 = vcvt.s32.f32 %v960
      %963 = vmin.xlane.f32.xlu0 %v962
      %v964 = vpop.xlane.xlu0 %963
      %vm965 = vcmp.eq.f32.partialorder %v962, %v964
      %v966 = vsel %vm965, %v961, inf
      %967 = vmin.xlane.f32.xlu0 %v966
      %v968 = vpop.xlane.xlu0 %967
      %v969 = vcvt.f32.s32 %v968
      %v970 = vcvt.f32.s32 %v964
      %v971 = vshll.u32 %v970, 16
      %v972 = vadd.s32 %v971, %v969
      %v973 = vsel %vm830, %v901, 2147483647
      %v974 = vand.u32 %v973, 65535
      %v975 = vshra.s32 %v973, 16
      %v976 = vcvt.s32.f32 %v974
      %v977 = vcvt.s32.f32 %v975
      %978 = vmin.xlane.f32.xlu0 %v977
      %v979 = vpop.xlane.xlu0 %978
      %vm980 = vcmp.eq.f32.partialorder %v977, %v979
      %v981 = vsel %vm980, %v976, inf
      %982 = vmin.xlane.f32.xlu0 %v981
      %v983 = vpop.xlane.xlu0 %982
      %v984 = vcvt.f32.s32 %v983
      %v985 = vcvt.f32.s32 %v979
      %v986 = vshll.u32 %v985, 16
      %v987 = vadd.s32 %v986, %v984
      %v988 = vsel %vm830, %v902, 2147483647
      %v989 = vand.u32 %v988, 65535
      %v990 = vshra.s32 %v988, 16
      %v991 = vcvt.s32.f32 %v989
      %v992 = vcvt.s32.f32 %v990
      %993 = vmin.xlane.f32.xlu0 %v992
      %v994 = vpop.xlane.xlu0 %993
      %vm995 = vcmp.eq.f32.partialorder %v992, %v994
      %v996 = vsel %vm995, %v991, inf
      %997 = vmin.xlane.f32.xlu0 %v996
      %v998 = vpop.xlane.xlu0 %997
      %v999 = vcvt.f32.s32 %v998
      %v1000 = vcvt.f32.s32 %v994
      %v1001 = vshll.u32 %v1000, 16
      %v1002 = vadd.s32 %v1001, %v999
      %v1003 = vsel %vm830, %v903, 2147483647
      %v1004 = vand.u32 %v1003, 65535
      %v1005 = vshra.s32 %v1003, 16
      %v1006 = vcvt.s32.f32 %v1004
      %v1007 = vcvt.s32.f32 %v1005
      %1008 = vmin.xlane.f32.xlu0 %v1007
      %v1009 = vpop.xlane.xlu0 %1008
      %vm1010 = vcmp.eq.f32.partialorder %v1007, %v1009
      %v1011 = vsel %vm1010, %v1006, inf
      %1012 = vmin.xlane.f32.xlu0 %v1011
      %v1013 = vpop.xlane.xlu0 %1012
      %v1014 = vcvt.f32.s32 %v1013
      %v1015 = vcvt.f32.s32 %v1009
      %v1016 = vshll.u32 %v1015, 16
      %v1017 = vadd.s32 %v1016, %v1014
      %v1018 = vsel %vm830, %v904, 2147483647
      %v1019 = vand.u32 %v1018, 65535
      %v1020 = vshra.s32 %v1018, 16
      %v1021 = vcvt.s32.f32 %v1019
      %v1022 = vcvt.s32.f32 %v1020
      %1023 = vmin.xlane.f32.xlu0 %v1022
      %v1024 = vpop.xlane.xlu0 %1023
      %vm1025 = vcmp.eq.f32.partialorder %v1022, %v1024
      %v1026 = vsel %vm1025, %v1021, inf
      %1027 = vmin.xlane.f32.xlu0 %v1026
      %v1028 = vpop.xlane.xlu0 %1027
      %v1029 = vcvt.f32.s32 %v1028
      %v1030 = vcvt.f32.s32 %v1024
      %v1031 = vshll.u32 %v1030, 16
      %v1032 = vadd.s32 %v1031, %v1029
      %v1033 = vsel %vm830, %v905, 2147483647
      %v1034 = vand.u32 %v1033, 65535
      %v1035 = vshra.s32 %v1033, 16
      %v1036 = vcvt.s32.f32 %v1034
      %v1037 = vcvt.s32.f32 %v1035
      %1038 = vmin.xlane.f32.xlu0 %v1037
      %v1039 = vpop.xlane.xlu0 %1038
      %vm1040 = vcmp.eq.f32.partialorder %v1037, %v1039
      %v1041 = vsel %vm1040, %v1036, inf
      %1042 = vmin.xlane.f32.xlu0 %v1041
      %v1043 = vpop.xlane.xlu0 %1042
      %v1044 = vcvt.f32.s32 %v1043
      %v1045 = vcvt.f32.s32 %v1039
      %v1046 = vshll.u32 %v1045, 16
      %v1047 = vadd.s32 %v1046, %v1044
      %v1048 = vsel %vm830, %v906, 2147483647
      %v1049 = vand.u32 %v1048, 65535
      %v1050 = vshra.s32 %v1048, 16
      %v1051 = vcvt.s32.f32 %v1049
      %v1052 = vcvt.s32.f32 %v1050
      %1053 = vmin.xlane.f32.xlu0 %v1052
      %v1054 = vpop.xlane.xlu0 %1053
      %vm1055 = vcmp.eq.f32.partialorder %v1052, %v1054
      %v1056 = vsel %vm1055, %v1051, inf
      %1057 = vmin.xlane.f32.xlu0 %v1056
      %v1058 = vpop.xlane.xlu0 %1057
      %v1059 = vcvt.f32.s32 %v1058
      %v1060 = vcvt.f32.s32 %v1054
      %v1061 = vshll.u32 %v1060, 16
      %v1062 = vadd.s32 %v1061, %v1059
      %v1063 = vsel %vm830, %v907, 2147483647
      %v1064 = vand.u32 %v1063, 65535
      %v1065 = vshra.s32 %v1063, 16
      %v1066 = vcvt.s32.f32 %v1064
      %v1067 = vcvt.s32.f32 %v1065
      %1068 = vmin.xlane.f32.xlu0 %v1067
      %v1069 = vpop.xlane.xlu0 %1068
      %vm1070 = vcmp.eq.f32.partialorder %v1067, %v1069
      %v1071 = vsel %vm1070, %v1066, inf
      %1072 = vmin.xlane.f32.xlu0 %v1071
      %v1073 = vpop.xlane.xlu0 %1072
      %v1074 = vcvt.f32.s32 %v1073
      %v1075 = vcvt.f32.s32 %v1069
      %v1076 = vshll.u32 %v1075, 16
      %v1077 = vadd.s32 %v1076, %v1074
      %v1078 = vsel %vm830, %v908, 2147483647
      %v1079 = vand.u32 %v1078, 65535
      %v1080 = vshra.s32 %v1078, 16
      %v1081 = vcvt.s32.f32 %v1079
      %v1082 = vcvt.s32.f32 %v1080
      %1083 = vmin.xlane.f32.xlu0 %v1082
      %v1084 = vpop.xlane.xlu0 %1083
      %vm1085 = vcmp.eq.f32.partialorder %v1082, %v1084
      %v1086 = vsel %vm1085, %v1081, inf
      %1087 = vmin.xlane.f32.xlu0 %v1086
      %v1088 = vpop.xlane.xlu0 %1087
      %v1089 = vcvt.f32.s32 %v1088
      %v1090 = vcvt.f32.s32 %v1084
      %v1091 = vshll.u32 %v1090, 16
      %v1092 = vadd.s32 %v1091, %v1089
      %v1093 = vsel %vm830, %v909, 2147483647
      %v1094 = vand.u32 %v1093, 65535
      %v1095 = vshra.s32 %v1093, 16
      %v1096 = vcvt.s32.f32 %v1094
      %v1097 = vcvt.s32.f32 %v1095
      %1098 = vmin.xlane.f32.xlu0 %v1097
      %v1099 = vpop.xlane.xlu0 %1098
      %vm1100 = vcmp.eq.f32.partialorder %v1097, %v1099
      %v1101 = vsel %vm1100, %v1096, inf
      %1102 = vmin.xlane.f32.xlu0 %v1101
      %v1103 = vpop.xlane.xlu0 %1102
      %v1104 = vcvt.f32.s32 %v1103
      %v1105 = vcvt.f32.s32 %v1099
      %v1106 = vshll.u32 %v1105, 16
      %v1107 = vadd.s32 %v1106, %v1104
      %v1108 = vsel %vm830, %v910, 2147483647
      %v1109 = vand.u32 %v1108, 65535
      %v1110 = vshra.s32 %v1108, 16
      %v1111 = vcvt.s32.f32 %v1109
      %v1112 = vcvt.s32.f32 %v1110
      %1113 = vmin.xlane.f32.xlu0 %v1112
      %v1114 = vpop.xlane.xlu0 %1113
      %vm1115 = vcmp.eq.f32.partialorder %v1112, %v1114
      %v1116 = vsel %vm1115, %v1111, inf
      %1117 = vmin.xlane.f32.xlu0 %v1116
      %v1118 = vpop.xlane.xlu0 %1117
      %v1119 = vcvt.f32.s32 %v1118
      %v1120 = vcvt.f32.s32 %v1114
      %v1121 = vshll.u32 %v1120, 16
      %v1122 = vadd.s32 %v1121, %v1119
      %v1123 = vsel %vm830, %v911, 2147483647
      %v1124 = vand.u32 %v1123, 65535
      %v1125 = vshra.s32 %v1123, 16
      %v1126 = vcvt.s32.f32 %v1124
      %v1127 = vcvt.s32.f32 %v1125
      %1128 = vmin.xlane.f32.xlu0 %v1127
      %v1129 = vpop.xlane.xlu0 %1128
      %vm1130 = vcmp.eq.f32.partialorder %v1127, %v1129
      %v1131 = vsel %vm1130, %v1126, inf
      %1132 = vmin.xlane.f32.xlu0 %v1131
      %v1133 = vpop.xlane.xlu0 %1132
      %v1134 = vcvt.f32.s32 %v1133
      %v1135 = vcvt.f32.s32 %v1129
      %v1136 = vshll.u32 %v1135, 16
      %v1137 = vadd.s32 %v1136, %v1134
      %v1138 = vsel %vm830, %v912, 2147483647
      %v1139 = vand.u32 %v1138, 65535
      %v1140 = vshra.s32 %v1138, 16
      %v1141 = vcvt.s32.f32 %v1139
      %v1142 = vcvt.s32.f32 %v1140
      %1143 = vmin.xlane.f32.xlu0 %v1142
      %v1144 = vpop.xlane.xlu0 %1143
      %vm1145 = vcmp.eq.f32.partialorder %v1142, %v1144
      %v1146 = vsel %vm1145, %v1141, inf
      %1147 = vmin.xlane.f32.xlu0 %v1146
      %v1148 = vpop.xlane.xlu0 %1147
      %v1149 = vcvt.f32.s32 %v1148
      %v1150 = vcvt.f32.s32 %v1144
      %v1151 = vshll.u32 %v1150, 16
      %v1152 = vadd.s32 %v1151, %v1149
      %vm1153 = vcmask 7168
      %1154 = vst.msk [vmem:[%s324] sm:$0xff] %vm1153, %v927
      %1155 = vst.msk [vmem:[%s324 + $0x8] sm:$0xff] %vm1153, %v942
      %1156 = vst.msk [vmem:[%s324 + $0x10] sm:$0xff] %vm1153, %v957
      %1157 = vst.msk [vmem:[%s324 + $0x18] sm:$0xff] %vm1153, %v972
      %1158 = vst.msk [vmem:[%s324 + $0x20] sm:$0xff] %vm1153, %v987
      %1159 = vst.msk [vmem:[%s324 + $0x28] sm:$0xff] %vm1153, %v1002
      %1160 = vst.msk [vmem:[%s324 + $0x30] sm:$0xff] %vm1153, %v1017
      %1161 = vst.msk [vmem:[%s324 + $0x38] sm:$0xff] %vm1153, %v1032
      %1162 = vst.msk [vmem:[%s324 + $0x40] sm:$0xff] %vm1153, %v1047
      %1163 = vst.msk [vmem:[%s324 + $0x48] sm:$0xff] %vm1153, %v1062
      %1164 = vst.msk [vmem:[%s324 + $0x50] sm:$0xff] %vm1153, %v1077
      %1165 = vst.msk [vmem:[%s324 + $0x58] sm:$0xff] %vm1153, %v1092
      %1166 = vst.msk [vmem:[%s324 + $0x60] sm:$0xff] %vm1153, %v1107
      %1167 = vst.msk [vmem:[%s324 + $0x68] sm:$0xff] %vm1153, %v1122
      %1168 = vst.msk [vmem:[%s324 + $0x70] sm:$0xff] %vm1153, %v1137
      %1169 = vst.msk [vmem:[%s324 + $0x78] sm:$0xff] %vm1153, %v1152
      %s1170 = smul.u32 16, %s18
      %p1171 = scmp.lt.s32.totalorder %s1170, 31
      %s1172 = scalar_select %p1171, %s1170, 31
      %s1173 = smul.addr %s1172, 8
      %s1174 = scalar_lea.vmem %s7, %s1173
      // Predicated region
      $region49: #{mlp_forward.1} parent=47 // pred_check
        %p1175 = pneg %p198
      $region50: #{mlp_forward.1} parent=47 // pred_check_branch
        %1177 = sbr.rel (%p1175) target = $region52
      $region51: #{mlp_forward.1} parent=47 // pred_region
        %s1178 = smul.u32 16, %s18
      $region52: #{mlp_forward.1} parent=47 // pred_fallthru
        _
    $region48: #{mlp_forward.1} parent=5 // pred_fallthru
      _
    %p1179 = scmp.le.s32.totalorder 2, %s13
    // Predicated region
    $region53: #{mlp_forward.1} parent=5 // pred_check
      %p1180 = pneg %p1179
    $region54: #{mlp_forward.1} parent=5 // pred_check_branch
      %1182 = sbr.rel (%p1180) target = $region56
    $region55: #{mlp_forward.1} parent=5 // pred_region
      %s1183 = ssub.s32 %s13, 2
      // Predicated region
      $region57: #{mlp_forward.1} parent=55 // pred_check
        %p1184 = pneg %p204
      $region58: #{mlp_forward.1} parent=55 // pred_check_branch
        %1186 = sbr.rel (%p1184) target = $region60
      $region59: #{mlp_forward.1} parent=55 // pred_region
        %s1187 = smul.u32 16, %s19
        %p1188 = scmp.lt.s32.totalorder %s1187, 31
        %s1189 = scalar_select %p1188, %s1187, 31
        %s1190 = smul.addr %s1189, 8
        %s1191 = scalar_lea.vmem %s7, %s1190
      $region60: #{mlp_forward.1} parent=55 // pred_fallthru
        _
    $region56: #{mlp_forward.1} parent=5 // pred_fallthru
      _
  $region6: #{mlp_forward.1} parent=0 // loop_footer
    %s17 = sadd.s32 1, %s13
  $region7: #{mlp_forward.1} parent=0 // loop_footer_branch
    %12 = sbr.rel target = $region3
  $region8: #{mlp_forward.1} parent=0 // loop_exit
    _

</llo_original>
